<compile_context>
chip_gen: v7x
topology: tpu7x:2x2x1
jax: 0.10.0
libtpu: 0.0.40
codegen_flags: <defaults>
</compile_context>

<pallas_src>
from functools import partial

import jax
import jax.numpy as jnp
import numpy as np
from jax.experimental import pallas as pl
from jax.experimental.pallas import tpu as pltpu

_LANE = 128
_SUBLANE = 8


def _round_up(x, m):
    return ((x + m - 1) // m) * m


def _batch_tile(B):
    # Batch lives on the lane axis -> tile must be a multiple of 128.
    # Aim for >= 2 grid steps (v7x megacore) and cap at 2048 so double-buffered
    # tiles stay tiny on every generation (incl. v5e's 16 MiB scoped VMEM).
    half = _round_up(pl.cdiv(B, 2), _LANE)
    return int(max(_LANE, min(2048, half)))


# ----------------------------------------------------------------------------
# Kernel
# ----------------------------------------------------------------------------
def _actor_critic_kernel(xt_ref, w1_ref, b1_ref, w2_ref, b2_ref,
                         wh_ref, bh_ref, out_ref):
    # All matmuls keep batch on the lane axis: results are (out_features, TB).
    h = jnp.dot(w1_ref[...], xt_ref[...], preferred_element_type=jnp.float32)
    h = jnp.maximum(h + b1_ref[...], 0.0)                       # shared_fc1 + ReLU
    h = jnp.dot(w2_ref[...], h, preferred_element_type=jnp.float32)
    h = jnp.maximum(h + b2_ref[...], 0.0)                       # shared_fc2 + ReLU
    out = jnp.dot(wh_ref[...], h, preferred_element_type=jnp.float32)
    out_ref[...] = (out + bh_ref[...]).astype(out_ref.dtype)    # fused actor+critic head


# ----------------------------------------------------------------------------
# Wrapper
# ----------------------------------------------------------------------------
@partial(jax.jit, static_argnames=("n_actions",))
def actor_critic_forward(x, w1, b1, w2, b2, wh, bh, *, n_actions):
    """x: (B, S).  Weights in PyTorch (out, in) orientation, prepared by
    prepare_params().  Returns (logits (B, A), value (B, 1))."""
    B, S = x.shape
    HP = wh.shape[0]                 # fused head rows, already a multiple of 8
    TB = _batch_tile(B)
    grid = (pl.cdiv(B, TB),)         # ragged last tile handled by Pallas masking

    xt = x.T                         # (S, B): batch on the lane axis

    def resident(arr):
        # Small weight / bias: same block every grid step -> VMEM-resident.
        return pl.BlockSpec(arr.shape, lambda i: (0, 0))

    out = pl.pallas_call(
        _actor_critic_kernel,
        out_shape=jax.ShapeDtypeStruct((HP, B), jnp.float32),
        grid=grid,
        in_specs=[
            pl.BlockSpec((S, TB), lambda i: (0, i)),   # x^T streamed per batch tile
            resident(w1), resident(b1),
            resident(w2), resident(b2),
            resident(wh), resident(bh),
        ],
        out_specs=pl.BlockSpec((HP, TB), lambda i: (0, i)),
        compiler_params=pltpu.CompilerParams(
            dimension_semantics=("parallel",)),        # shard batch tiles over 2 TCs on v7x
    )(xt, w1, b1, w2, b2, wh, bh)

    logits = out[:n_actions, :].T                     # (B, A)
    value = out[n_actions:n_actions + 1, :].T         # (B, 1)
    return logits, value


# ----------------------------------------------------------------------------
# Parameters (PyTorch-equivalent init) + one-time kernel-layout prep
# ----------------------------------------------------------------------------
def _orthogonal(key, out_features, in_features, gain):
    # Matches torch.nn.init.orthogonal_ semantics (up to RNG stream).
    init = jax.nn.initializers.orthogonal(scale=gain)
    return init(key, (out_features, in_features), jnp.float32)   # (out, in)


def make_params(state_dim, action_space_size, hidden_dim, seed=0):
    """PyTorch-shaped parameters: W (out, in), b (out,)."""
    k1, k2, k3, k4 = jax.random.split(jax.random.PRNGKey(seed), 4)
    g = float(np.sqrt(2.0))
    w1 = _orthogonal(k1, hidden_dim, state_dim, g)
    b1 = jnp.zeros((hidden_dim,), jnp.float32)
    w2 = _orthogonal(k2, hidden_dim, hidden_dim, g)
    b2 = jnp.zeros((hidden_dim,), jnp.float32)
    wa = _orthogonal(k3, action_space_size, hidden_dim, 0.01)
    ba = jnp.zeros((action_space_size,), jnp.float32)
    wc = _orthogonal(k4, 1, hidden_dim, 1.0)
    bc = jnp.zeros((1,), jnp.float32)
    return w1, b1, w2, b2, wa, ba, wc, bc


def prepare_params(w1, b1, w2, b2, wa, ba, wc, bc):
    """One-time prep (hoisted out of the per-call forward):
       * actor + critic heads fused and zero-padded to a sublane multiple,
       * biases reshaped to (out, 1) columns for the batch-on-lanes layout.
       (Optionally cast weights/x to bf16 here on v6e/v7x; needs ~1e-2 atol.)
    """
    A = wa.shape[0]
    n_head = A + 1
    n_pad = _round_up(n_head, _SUBLANE)
    wh = jnp.concatenate([wa, wc], axis=0)                 # (A+1, H)
    wh = jnp.pad(wh, ((0, n_pad - n_head), (0, 0)))        # (n_pad, H)
    bh = jnp.concatenate([ba, bc], axis=0)                 # (A+1,)
    bh = jnp.pad(bh, (0, n_pad - n_head))                  # (n_pad,)
    return (w1, b1.reshape(-1, 1), w2, b2.reshape(-1, 1),
            wh, bh.reshape(-1, 1))


def reference_forward(x, w1, b1, w2, b2, wa, ba, wc, bc):
    h1 = jax.nn.relu(x @ w1.T + b1)
    h2 = jax.nn.relu(h1 @ w2.T + b2)
    return h2 @ wa.T + ba, h2 @ wc.T + bc


if __name__ == "__main__":
    state_dim = 8
    action_space_size = 4
    hidden_dim = 32
    batch = 2

    raw = make_params(state_dim, action_space_size, hidden_dim, seed=0)
    w1, b1, w2, b2, wh, bh = prepare_params(*raw)

    x = jax.random.normal(jax.random.PRNGKey(0), (batch, state_dim), jnp.float32)

    logits, value = actor_critic_forward(
        x, w1, b1, w2, b2, wh, bh, n_actions=action_space_size)
    jax.block_until_ready((logits, value))

    ref_logits, ref_value = reference_forward(x, *raw)
    assert logits.shape == (batch, action_space_size)
    assert value.shape == (batch, 1)
    assert jnp.allclose(logits, ref_logits, atol=1e-5, rtol=1e-5)
    assert jnp.allclose(value, ref_value, atol=1e-5, rtol=1e-5)

    print("KERNEL_OK")
</pallas_src>

<mosaic_0001>
module attributes {stable_mosaic.version = 11 : i64} {
  func.func @_actor_critic_kernel(%arg0: i32, %arg1: memref<8x128xf32, #tpu.memory_space<vmem>>, %arg2: memref<32x8xf32, #tpu.memory_space<vmem>>, %arg3: memref<32x1xf32, #tpu.memory_space<vmem>>, %arg4: memref<32x32xf32, #tpu.memory_space<vmem>>, %arg5: memref<32x1xf32, #tpu.memory_space<vmem>>, %arg6: memref<8x32xf32, #tpu.memory_space<vmem>>, %arg7: memref<8x1xf32, #tpu.memory_space<vmem>>, %arg8: memref<8x128xf32, #tpu.memory_space<vmem>>) attributes {dimension_semantics = [#tpu.dimension_semantics<parallel>], iteration_bounds = array<i64: 1>, scalar_prefetch = 0 : i64, scratch_operands = 0 : i64, tpu.core_type = #tpu.core_type<tc>, window_params = [{transform_indices = @transform_0, window_bounds = array<i64: 8, 128>}, {pipeline_mode = #tpu.pipeline_mode<synchronous>, transform_indices = @transform_1, window_bounds = array<i64: 32, 8>}, {pipeline_mode = #tpu.pipeline_mode<synchronous>, transform_indices = @transform_2, window_bounds = array<i64: 32, 1>}, {pipeline_mode = #tpu.pipeline_mode<synchronous>, transform_indices = @transform_3, window_bounds = array<i64: 32, 32>}, {pipeline_mode = #tpu.pipeline_mode<synchronous>, transform_indices = @transform_4, window_bounds = array<i64: 32, 1>}, {pipeline_mode = #tpu.pipeline_mode<synchronous>, transform_indices = @transform_5, window_bounds = array<i64: 8, 32>}, {pipeline_mode = #tpu.pipeline_mode<synchronous>, transform_indices = @transform_6, window_bounds = array<i64: 8, 1>}, {transform_indices = @transform_7, window_bounds = array<i64: 8, 128>}]} {
    %c0 = arith.constant 0 : index
    %c0_0 = arith.constant 0 : index
    %0 = vector.load %arg2[%c0, %c0_0] : memref<32x8xf32, #tpu.memory_space<vmem>>, vector<32x8xf32>
    %c0_1 = arith.constant 0 : index
    %c0_2 = arith.constant 0 : index
    %1 = vector.load %arg1[%c0_1, %c0_2] : memref<8x128xf32, #tpu.memory_space<vmem>>, vector<8x128xf32>
    %cst = arith.constant dense<0.000000e+00> : vector<32x128xf32>
    %2 = tpu.matmul %0, %1, %cst {dimension_numbers = #tpu.dot_dimension_numbers<[1], [0], [0], [1], [0, 0, 1, 1], [], []>} : vector<32x8xf32>, vector<8x128xf32>, vector<32x128xf32> -> vector<32x128xf32>
    %c0_3 = arith.constant 0 : index
    %c0_4 = arith.constant 0 : index
    %3 = vector.load %arg3[%c0_3, %c0_4] : memref<32x1xf32, #tpu.memory_space<vmem>>, vector<32x1xf32>
    %4 = vector.broadcast %3 : vector<32x1xf32> to vector<32x128xf32>
    %5 = arith.addf %2, %4 : vector<32x128xf32>
    %cst_5 = arith.constant 0.000000e+00 : f32
    %6 = vector.broadcast %cst_5 : f32 to vector<32x128xf32>
    %7 = arith.maximumf %5, %6 : vector<32x128xf32>
    %c0_6 = arith.constant 0 : index
    %c0_7 = arith.constant 0 : index
    %8 = vector.load %arg4[%c0_6, %c0_7] : memref<32x32xf32, #tpu.memory_space<vmem>>, vector<32x32xf32>
    %cst_8 = arith.constant dense<0.000000e+00> : vector<32x128xf32>
    %9 = tpu.matmul %8, %7, %cst_8 {dimension_numbers = #tpu.dot_dimension_numbers<[1], [0], [0], [1], [0, 0, 1, 1], [], []>} : vector<32x32xf32>, vector<32x128xf32>, vector<32x128xf32> -> vector<32x128xf32>
    %c0_9 = arith.constant 0 : index
    %c0_10 = arith.constant 0 : index
    %10 = vector.load %arg5[%c0_9, %c0_10] : memref<32x1xf32, #tpu.memory_space<vmem>>, vector<32x1xf32>
    %11 = vector.broadcast %10 : vector<32x1xf32> to vector<32x128xf32>
    %12 = arith.addf %9, %11 : vector<32x128xf32>
    %cst_11 = arith.constant 0.000000e+00 : f32
    %13 = vector.broadcast %cst_11 : f32 to vector<32x128xf32>
    %14 = arith.maximumf %12, %13 : vector<32x128xf32>
    %c0_12 = arith.constant 0 : index
    %c0_13 = arith.constant 0 : index
    %15 = vector.load %arg6[%c0_12, %c0_13] : memref<8x32xf32, #tpu.memory_space<vmem>>, vector<8x32xf32>
    %cst_14 = arith.constant dense<0.000000e+00> : vector<8x128xf32>
    %16 = tpu.matmul %15, %14, %cst_14 {dimension_numbers = #tpu.dot_dimension_numbers<[1], [0], [0], [1], [0, 0, 1, 1], [], []>} : vector<8x32xf32>, vector<32x128xf32>, vector<8x128xf32> -> vector<8x128xf32>
    %c0_15 = arith.constant 0 : index
    %c0_16 = arith.constant 0 : index
    %17 = vector.load %arg7[%c0_15, %c0_16] : memref<8x1xf32, #tpu.memory_space<vmem>>, vector<8x1xf32>
    %18 = vector.broadcast %17 : vector<8x1xf32> to vector<8x128xf32>
    %19 = arith.addf %16, %18 : vector<8x128xf32>
    %c0_17 = arith.constant 0 : index
    %c0_18 = arith.constant 0 : index
    %20 = vector.load %arg8[%c0_17, %c0_18] : memref<8x128xf32, #tpu.memory_space<vmem>>, vector<8x128xf32>
    tpu.vector_store %arg8[%c0_17, %c0_18], %19 {strides = array<i32>} : memref<8x128xf32, #tpu.memory_space<vmem>>, vector<8x128xf32>,
    return
  }
  func.func @transform_0(%arg0: i32) -> (i32, i32) {
    %c0_i32 = arith.constant 0 : i32
    %c0_i32_0 = arith.constant 0 : i32
    return %c0_i32, %arg0 : i32, i32
  }
  func.func @transform_1(%arg0: i32) -> (i32, i32) {
    %c0_i32 = arith.constant 0 : i32
    %c0_i32_0 = arith.constant 0 : i32
    %c0_i32_1 = arith.constant 0 : i32
    return %c0_i32, %c0_i32_0 : i32, i32
  }
  func.func @transform_2(%arg0: i32) -> (i32, i32) {
    %c0_i32 = arith.constant 0 : i32
    %c0_i32_0 = arith.constant 0 : i32
    %c0_i32_1 = arith.constant 0 : i32
    return %c0_i32, %c0_i32_0 : i32, i32
  }
  func.func @transform_3(%arg0: i32) -> (i32, i32) {
    %c0_i32 = arith.constant 0 : i32
    %c0_i32_0 = arith.constant 0 : i32
    %c0_i32_1 = arith.constant 0 : i32
    return %c0_i32, %c0_i32_0 : i32, i32
  }
  func.func @transform_4(%arg0: i32) -> (i32, i32) {
    %c0_i32 = arith.constant 0 : i32
    %c0_i32_0 = arith.constant 0 : i32
    %c0_i32_1 = arith.constant 0 : i32
    return %c0_i32, %c0_i32_0 : i32, i32
  }
  func.func @transform_5(%arg0: i32) -> (i32, i32) {
    %c0_i32 = arith.constant 0 : i32
    %c0_i32_0 = arith.constant 0 : i32
    %c0_i32_1 = arith.constant 0 : i32
    return %c0_i32, %c0_i32_0 : i32, i32
  }
  func.func @transform_6(%arg0: i32) -> (i32, i32) {
    %c0_i32 = arith.constant 0 : i32
    %c0_i32_0 = arith.constant 0 : i32
    %c0_i32_1 = arith.constant 0 : i32
    return %c0_i32, %c0_i32_0 : i32, i32
  }
  func.func @transform_7(%arg0: i32) -> (i32, i32) {
    %c0_i32 = arith.constant 0 : i32
    %c0_i32_0 = arith.constant 0 : i32
    return %c0_i32, %arg0 : i32, i32
  }
}

</mosaic_0001>

<llo_original>
// kernel: actor_critic_forward.1
$region0: #{actor_critic_forward.1}
  #allocation0 [shape = 'u32[]', space=smem, size = 0x4, offset = 0x4, fixed_abs, tag = 'smem constant byte address 0x4 - core index']
  #allocation1 [shape = 'u32[144,128]{1,0:T(1,128)}', space=vmem, size = 0x12000, scoped, tag = 'internal scratch']
  %s0 = inlined_call_operand.vmem [shape: f32[8,2], index: 0, kind: input, shape index: {}]
  %s1 = inlined_call_operand.vmem [shape: f32[32,8], index: 1, kind: input, shape index: {}]
  %s2 = inlined_call_operand.vmem [shape: f32[32,1], index: 2, kind: input, shape index: {}]
  %s3 = inlined_call_operand.vmem [shape: f32[32,32], index: 3, kind: input, shape index: {}]
  %s4 = inlined_call_operand.vmem [shape: f32[32,1], index: 4, kind: input, shape index: {}]
  %s5 = inlined_call_operand.vmem [shape: f32[8,32], index: 5, kind: input, shape index: {}]
  %s6 = inlined_call_operand.vmem [shape: f32[8,1], index: 6, kind: input, shape index: {}]
  %s7 = inlined_call_operand.vmem [shape: f32[8,2], index: 7, kind: output, shape index: {}]
  %s8 = sld [smem:[#allocation0]]
  $region38: #{actor_critic_forward.1} parent=0
    _
  %s10 = ssub.s32 1, %s8
  %s11 = scalar_select 0, %s10, %s8
  // Predicated region
  $region2: #{actor_critic_forward.1} parent=0 // pred_check
    _
  $region3: #{actor_critic_forward.1} parent=0 // pred_check_branch
    %13 = sbr.rel (0) target = $region5
  $region4: #{actor_critic_forward.1} parent=0 // pred_region
    _
  $region5: #{actor_critic_forward.1} parent=0 // pred_fallthru
    _
  // Predicated region
  $region6: #{actor_critic_forward.1} parent=0 // pred_check
    _
  $region7: #{actor_critic_forward.1} parent=0 // pred_check_branch
    %15 = sbr.rel (0) target = $region9
  $region8: #{actor_critic_forward.1} parent=0 // pred_region
    _
  $region9: #{actor_critic_forward.1} parent=0 // pred_fallthru
    _
  // Predicated region
  $region10: #{actor_critic_forward.1} parent=0 // pred_check
    _
  $region11: #{actor_critic_forward.1} parent=0 // pred_check_branch
    %17 = sbr.rel (0) target = $region13
  $region12: #{actor_critic_forward.1} parent=0 // pred_region
    _
  $region13: #{actor_critic_forward.1} parent=0 // pred_fallthru
    _
  // Predicated region
  $region14: #{actor_critic_forward.1} parent=0 // pred_check
    _
  $region15: #{actor_critic_forward.1} parent=0 // pred_check_branch
    %19 = sbr.rel (0) target = $region17
  $region16: #{actor_critic_forward.1} parent=0 // pred_region
    _
  $region17: #{actor_critic_forward.1} parent=0 // pred_fallthru
    _
  // Predicated region
  $region18: #{actor_critic_forward.1} parent=0 // pred_check
    _
  $region19: #{actor_critic_forward.1} parent=0 // pred_check_branch
    %21 = sbr.rel (0) target = $region21
  $region20: #{actor_critic_forward.1} parent=0 // pred_region
    _
  $region21: #{actor_critic_forward.1} parent=0 // pred_fallthru
    _
  // Predicated region
  $region22: #{actor_critic_forward.1} parent=0 // pred_check
    _
  $region23: #{actor_critic_forward.1} parent=0 // pred_check_branch
    %23 = sbr.rel (0) target = $region25
  $region24: #{actor_critic_forward.1} parent=0 // pred_region
    _
  $region25: #{actor_critic_forward.1} parent=0 // pred_fallthru
    _
  // Predicated region
  $region26: #{actor_critic_forward.1} parent=0 // pred_check
    _
  $region27: #{actor_critic_forward.1} parent=0 // pred_check_branch
    %25 = sbr.rel (0) target = $region29
  $region28: #{actor_critic_forward.1} parent=0 // pred_region
    _
  $region29: #{actor_critic_forward.1} parent=0 // pred_fallthru
    _
  %v26 = vld [vmem:[%s1] sm:$0xff]
  %v27 = vld [vmem:[%s1 + $0x8] sm:$0xff]
  %v28 = vld [vmem:[%s1 + $0x10] sm:$0xff]
  %v29 = vld [vmem:[%s1 + $0x18] sm:$0xff]
  %v30 = vld [vmem:[%s0] sm:$0xff]
  %v31 = vld [vmem:[%s2] sm:$0xff]
  %v32 = vld [vmem:[%s2 + $0x8] sm:$0xff]
  %v33 = vld [vmem:[%s2 + $0x10] sm:$0xff]
  %v34 = vld [vmem:[%s2 + $0x18] sm:$0xff]
  %36 = vset.pattern.permute.xlu0 0
  %37 = vperm.xlu0 %36, %v31
  %v38 = vpop.permute.xlu0 %37
  %41 = vset.pattern.permute.xlu0 0
  %42 = vperm.xlu0 %41, %v32
  %v43 = vpop.permute.xlu0 %42
  %46 = vset.pattern.permute.xlu0 0
  %47 = vperm.xlu0 %46, %v33
  %v48 = vpop.permute.xlu0 %47
  %51 = vset.pattern.permute.xlu0 0
  %52 = vperm.xlu0 %51, %v34
  %v53 = vpop.permute.xlu0 %52
  %vm55 = vcmask 64512
  %v57 = vsel %vm55, %v26, 0
  %v60 = vsel %vm55, %v27, 0
  %v63 = vsel %vm55, %v28, 0
  %v66 = vsel %vm55, %v29, 0
  %68 = vmatprep.subr.mxu0 0.0
  %69 = vmatpush1.msra.mxu0 %v30
  %70 = vmatprep.subr.mxu0 0.0
  %71 = vmatpush1.msra.mxu0 0.0
  %72 = vmatprep.subr.mxu0 0.0
  %73 = vmatpush1.msra.mxu0 0.0
  %74 = vmatprep.subr.mxu0 0.0
  %75 = vmatpush1.msra.mxu0 0.0
  %76 = vmatprep.subr.mxu0 0.0
  %77 = vmatpush1.msra.mxu0 0.0
  %78 = vmatprep.subr.mxu0 0.0
  %79 = vmatpush1.msra.mxu0 0.0
  %80 = vmatprep.subr.mxu0 0.0
  %81 = vmatpush1.msra.mxu0 0.0
  %82 = vmatprep.subr.mxu0 0.0
  %83 = vmatpush1.msra.mxu0 0.0
  %84 = vmatprep.subr.mxu0 0.0
  %85 = vmatpush1.msra.mxu0 0.0
  %86 = vmatprep.subr.mxu0 0.0
  %87 = vmatpush1.msra.mxu0 0.0
  %88 = vmatprep.subr.mxu0 0.0
  %89 = vmatpush1.msra.mxu0 0.0
  %90 = vmatprep.subr.mxu0 0.0
  %91 = vmatpush1.msra.mxu0 0.0
  %92 = vmatprep.subr.mxu0 0.0
  %93 = vmatpush1.msra.mxu0 0.0
  %94 = vmatprep.subr.mxu0 0.0
  %95 = vmatpush1.msra.mxu0 0.0
  %96 = vmatprep.subr.mxu0 0.0
  %97 = vmatpush1.msra.mxu0 0.0
  %98 = vmatprep.subr.mxu0 0.0
  %99 = vmatpush1.msra.mxu0 0.0
  %100 = vmatprep.subr.mxu0 0.0
  %101 = vmatpush1.msra.mxu0 0.0
  %102 = vmatprep.subr.mxu0 0.0
  %103 = vmatpush1.msra.mxu0 0.0
  %104 = vmatprep.subr.mxu0 0.0
  %105 = vmatpush1.msra.mxu0 0.0
  %106 = vmatprep.subr.mxu0 0.0
  %107 = vmatpush1.msra.mxu0 0.0
  %108 = vmatprep.subr.mxu0 0.0
  %109 = vmatpush1.msra.mxu0 0.0
  %110 = vmatprep.subr.mxu0 0.0
  %111 = vmatpush1.msra.mxu0 0.0
  %112 = vmatprep.subr.mxu0 0.0
  %113 = vmatpush1.msra.mxu0 0.0
  %114 = vmatprep.subr.mxu0 0.0
  %115 = vmatpush1.msra.mxu0 0.0
  %116 = vmatprep.subr.mxu0 0.0
  %117 = vmatpush1.msra.mxu0 0.0
  %118 = vmatprep.subr.mxu0 0.0
  %119 = vmatpush1.msra.mxu0 0.0
  %120 = vmatprep.subr.mxu0 0.0
  %121 = vmatpush1.msra.mxu0 0.0
  %122 = vmatprep.subr.mxu0 0.0
  %123 = vmatpush1.msra.mxu0 0.0
  %124 = vmatprep.subr.mxu0 0.0
  %125 = vmatpush1.msra.mxu0 0.0
  %126 = vmatprep.subr.mxu0 0.0
  %127 = vmatpush1.msra.mxu0 0.0
  %128 = vmatprep.subr.mxu0 0.0
  %129 = vmatpush1.msra.mxu0 0.0
  %130 = vmatprep.subr.mxu0 0.0
  %131 = vmatpush1.msra.mxu0 0.0
  %132 = vmatprep.mubr.f32.mxu0 0.0
  %133 = vmatmul.mubr.f32.gmra.mrb[0].mxu0 %v57
  %v134 = vpop.f32.mrb[0].mxu0
  %v135 = vadd.f32 %v38, %v134
  %v136 = vpop.f32.mrb[0].mxu0
  %137 = vmatprep.mubr.f32.mxu0 0.0
  %138 = vmatmul.mubr.f32.gmra.mrb[0].mxu0 %v60
  %v139 = vpop.f32.mrb[0].mxu0
  %v140 = vadd.f32 %v43, %v139
  %v141 = vpop.f32.mrb[0].mxu0
  %142 = vmatprep.mubr.f32.mxu0 0.0
  %143 = vmatmul.mubr.f32.gmra.mrb[0].mxu0 %v63
  %v144 = vpop.f32.mrb[0].mxu0
  %v145 = vadd.f32 %v48, %v144
  %v146 = vpop.f32.mrb[0].mxu0
  %147 = vmatprep.mubr.f32.mxu0 0.0
  %148 = vmatmul.mubr.f32.gmra.mrb[0].mxu0 %v66
  %v149 = vpop.f32.mrb[0].mxu0
  %v150 = vadd.f32 %v53, %v149
  %v151 = vpop.f32.mrb[0].mxu0
  %152 = vdwg.mxu0
  %v153 = vmax.f32 %v135, 0.0
  %v154 = vmax.f32 %v140, 0.0
  %v155 = vmax.f32 %v145, 0.0
  %v156 = vmax.f32 %v150, 0.0
  %v157 = vld [vmem:[%s3] sm:$0xff]
  %v158 = vld [vmem:[%s3 + $0x8] sm:$0xff]
  %v159 = vld [vmem:[%s3 + $0x10] sm:$0xff]
  %v160 = vld [vmem:[%s3 + $0x18] sm:$0xff]
  %v161 = vld [vmem:[%s4] sm:$0xff]
  %v162 = vld [vmem:[%s4 + $0x8] sm:$0xff]
  %v163 = vld [vmem:[%s4 + $0x10] sm:$0xff]
  %v164 = vld [vmem:[%s4 + $0x18] sm:$0xff]
  %166 = vset.pattern.permute.xlu0 0
  %167 = vperm.xlu0 %166, %v161
  %v168 = vpop.permute.xlu0 %167
  %171 = vset.pattern.permute.xlu0 0
  %172 = vperm.xlu0 %171, %v162
  %v173 = vpop.permute.xlu0 %172
  %176 = vset.pattern.permute.xlu0 0
  %177 = vperm.xlu0 %176, %v163
  %v178 = vpop.permute.xlu0 %177
  %181 = vset.pattern.permute.xlu0 0
  %182 = vperm.xlu0 %181, %v164
  %v183 = vpop.permute.xlu0 %182
  %vm185 = vcmask 261120
  %v187 = vsel %vm185, %v157, 0
  %v190 = vsel %vm185, %v158, 0
  %v193 = vsel %vm185, %v159, 0
  %v196 = vsel %vm185, %v160, 0
  %198 = vmatprep.subr.mxu0 0.0
  %199 = vmatpush1.msra.mxu0 %v153
  %200 = vmatprep.subr.mxu0 0.0
  %201 = vmatpush1.msra.mxu0 %v154
  %202 = vmatprep.subr.mxu0 0.0
  %203 = vmatpush1.msra.mxu0 %v155
  %204 = vmatprep.subr.mxu0 0.0
  %205 = vmatpush1.msra.mxu0 %v156
  %206 = vmatprep.subr.mxu0 0.0
  %207 = vmatpush1.msra.mxu0 0.0
  %208 = vmatprep.subr.mxu0 0.0
  %209 = vmatpush1.msra.mxu0 0.0
  %210 = vmatprep.subr.mxu0 0.0
  %211 = vmatpush1.msra.mxu0 0.0
  %212 = vmatprep.subr.mxu0 0.0
  %213 = vmatpush1.msra.mxu0 0.0
  %214 = vmatprep.subr.mxu0 0.0
  %215 = vmatpush1.msra.mxu0 0.0
  %216 = vmatprep.subr.mxu0 0.0
  %217 = vmatpush1.msra.mxu0 0.0
  %218 = vmatprep.subr.mxu0 0.0
  %219 = vmatpush1.msra.mxu0 0.0
  %220 = vmatprep.subr.mxu0 0.0
  %221 = vmatpush1.msra.mxu0 0.0
  %222 = vmatprep.subr.mxu0 0.0
  %223 = vmatpush1.msra.mxu0 0.0
  %224 = vmatprep.subr.mxu0 0.0
  %225 = vmatpush1.msra.mxu0 0.0
  %226 = vmatprep.subr.mxu0 0.0
  %227 = vmatpush1.msra.mxu0 0.0
  %228 = vmatprep.subr.mxu0 0.0
  %229 = vmatpush1.msra.mxu0 0.0
  %230 = vmatprep.subr.mxu0 0.0
  %231 = vmatpush1.msra.mxu0 0.0
  %232 = vmatprep.subr.mxu0 0.0
  %233 = vmatpush1.msra.mxu0 0.0
  %234 = vmatprep.subr.mxu0 0.0
  %235 = vmatpush1.msra.mxu0 0.0
  %236 = vmatprep.subr.mxu0 0.0
  %237 = vmatpush1.msra.mxu0 0.0
  %238 = vmatprep.subr.mxu0 0.0
  %239 = vmatpush1.msra.mxu0 0.0
  %240 = vmatprep.subr.mxu0 0.0
  %241 = vmatpush1.msra.mxu0 0.0
  %242 = vmatprep.subr.mxu0 0.0
  %243 = vmatpush1.msra.mxu0 0.0
  %244 = vmatprep.subr.mxu0 0.0
  %245 = vmatpush1.msra.mxu0 0.0
  %246 = vmatprep.subr.mxu0 0.0
  %247 = vmatpush1.msra.mxu0 0.0
  %248 = vmatprep.subr.mxu0 0.0
  %249 = vmatpush1.msra.mxu0 0.0
  %250 = vmatprep.subr.mxu0 0.0
  %251 = vmatpush1.msra.mxu0 0.0
  %252 = vmatprep.subr.mxu0 0.0
  %253 = vmatpush1.msra.mxu0 0.0
  %254 = vmatprep.subr.mxu0 0.0
  %255 = vmatpush1.msra.mxu0 0.0
  %256 = vmatprep.subr.mxu0 0.0
  %257 = vmatpush1.msra.mxu0 0.0
  %258 = vmatprep.subr.mxu0 0.0
  %259 = vmatpush1.msra.mxu0 0.0
  %260 = vmatprep.subr.mxu0 0.0
  %261 = vmatpush1.msra.mxu0 0.0
  %262 = vmatprep.mubr.f32.mxu0 0.0
  %263 = vmatmul.mubr.f32.gmra.mrb[0].mxu0 %v187
  %v264 = vpop.f32.mrb[0].mxu0
  %v265 = vadd.f32 %v168, %v264
  %v266 = vpop.f32.mrb[0].mxu0
  %267 = vmatprep.mubr.f32.mxu0 0.0
  %268 = vmatmul.mubr.f32.gmra.mrb[0].mxu0 %v190
  %v269 = vpop.f32.mrb[0].mxu0
  %v270 = vadd.f32 %v173, %v269
  %v271 = vpop.f32.mrb[0].mxu0
  %272 = vmatprep.mubr.f32.mxu0 0.0
  %273 = vmatmul.mubr.f32.gmra.mrb[0].mxu0 %v193
  %v274 = vpop.f32.mrb[0].mxu0
  %v275 = vadd.f32 %v178, %v274
  %v276 = vpop.f32.mrb[0].mxu0
  %277 = vmatprep.mubr.f32.mxu0 0.0
  %278 = vmatmul.mubr.f32.gmra.mrb[0].mxu0 %v196
  %v279 = vpop.f32.mrb[0].mxu0
  %v280 = vadd.f32 %v183, %v279
  %v281 = vpop.f32.mrb[0].mxu0
  %282 = vdwg.mxu0
  %v283 = vmax.f32 %v265, 0.0
  %v284 = vmax.f32 %v270, 0.0
  %v285 = vmax.f32 %v275, 0.0
  %v286 = vmax.f32 %v280, 0.0
  %v287 = vld [vmem:[%s5] sm:$0xff]
  %v288 = vld [vmem:[%s6] sm:$0xff]
  %290 = vset.pattern.permute.xlu0 0
  %291 = vperm.xlu0 %290, %v288
  %v292 = vpop.permute.xlu0 %291
  %v295 = vsel %vm185, %v287, 0
  %297 = vmatprep.subr.mxu0 0.0
  %298 = vmatpush1.msra.mxu0 %v283
  %299 = vmatprep.subr.mxu0 0.0
  %300 = vmatpush1.msra.mxu0 %v284
  %301 = vmatprep.subr.mxu0 0.0
  %302 = vmatpush1.msra.mxu0 %v285
  %303 = vmatprep.subr.mxu0 0.0
  %304 = vmatpush1.msra.mxu0 %v286
  %305 = vmatprep.subr.mxu0 0.0
  %306 = vmatpush1.msra.mxu0 0.0
  %307 = vmatprep.subr.mxu0 0.0
  %308 = vmatpush1.msra.mxu0 0.0
  %309 = vmatprep.subr.mxu0 0.0
  %310 = vmatpush1.msra.mxu0 0.0
  %311 = vmatprep.subr.mxu0 0.0
  %312 = vmatpush1.msra.mxu0 0.0
  %313 = vmatprep.subr.mxu0 0.0
  %314 = vmatpush1.msra.mxu0 0.0
  %315 = vmatprep.subr.mxu0 0.0
  %316 = vmatpush1.msra.mxu0 0.0
  %317 = vmatprep.subr.mxu0 0.0
  %318 = vmatpush1.msra.mxu0 0.0
  %319 = vmatprep.subr.mxu0 0.0
  %320 = vmatpush1.msra.mxu0 0.0
  %321 = vmatprep.subr.mxu0 0.0
  %322 = vmatpush1.msra.mxu0 0.0
  %323 = vmatprep.subr.mxu0 0.0
  %324 = vmatpush1.msra.mxu0 0.0
  %325 = vmatprep.subr.mxu0 0.0
  %326 = vmatpush1.msra.mxu0 0.0
  %327 = vmatprep.subr.mxu0 0.0
  %328 = vmatpush1.msra.mxu0 0.0
  %329 = vmatprep.subr.mxu0 0.0
  %330 = vmatpush1.msra.mxu0 0.0
  %331 = vmatprep.subr.mxu0 0.0
  %332 = vmatpush1.msra.mxu0 0.0
  %333 = vmatprep.subr.mxu0 0.0
  %334 = vmatpush1.msra.mxu0 0.0
  %335 = vmatprep.subr.mxu0 0.0
  %336 = vmatpush1.msra.mxu0 0.0
  %337 = vmatprep.subr.mxu0 0.0
  %338 = vmatpush1.msra.mxu0 0.0
  %339 = vmatprep.subr.mxu0 0.0
  %340 = vmatpush1.msra.mxu0 0.0
  %341 = vmatprep.subr.mxu0 0.0
  %342 = vmatpush1.msra.mxu0 0.0
  %343 = vmatprep.subr.mxu0 0.0
  %344 = vmatpush1.msra.mxu0 0.0
  %345 = vmatprep.subr.mxu0 0.0
  %346 = vmatpush1.msra.mxu0 0.0
  %347 = vmatprep.subr.mxu0 0.0
  %348 = vmatpush1.msra.mxu0 0.0
  %349 = vmatprep.subr.mxu0 0.0
  %350 = vmatpush1.msra.mxu0 0.0
  %351 = vmatprep.subr.mxu0 0.0
  %352 = vmatpush1.msra.mxu0 0.0
  %353 = vmatprep.subr.mxu0 0.0
  %354 = vmatpush1.msra.mxu0 0.0
  %355 = vmatprep.subr.mxu0 0.0
  %356 = vmatpush1.msra.mxu0 0.0
  %357 = vmatprep.subr.mxu0 0.0
  %358 = vmatpush1.msra.mxu0 0.0
  %359 = vmatprep.subr.mxu0 0.0
  %360 = vmatpush1.msra.mxu0 0.0
  %361 = vmatprep.mubr.f32.mxu0 0.0
  %362 = vmatmul.mubr.f32.gmra.mrb[0].mxu0 %v295
  %v363 = vpop.f32.mrb[0].mxu0
  %v364 = vadd.f32 %v292, %v363
  %v365 = vpop.f32.mrb[0].mxu0
  %366 = vdwg.mxu0
  %367 = vst [vmem:[%s7] sm:$0xff] %v364
  // Predicated region
  $region30: #{actor_critic_forward.1} parent=0 // pred_check
    _
  $region31: #{actor_critic_forward.1} parent=0 // pred_check_branch
    %369 = sbr.rel (0) target = $region33
  $region32: #{actor_critic_forward.1} parent=0 // pred_region
    _
  $region33: #{actor_critic_forward.1} parent=0 // pred_fallthru
    _
  // Predicated region
  $region34: #{actor_critic_forward.1} parent=0 // pred_check
    _
  $region35: #{actor_critic_forward.1} parent=0 // pred_check_branch
    %371 = sbr.rel (0) target = $region37
  $region36: #{actor_critic_forward.1} parent=0 // pred_region
    _
  $region37: #{actor_critic_forward.1} parent=0 // pred_fallthru
    _

</llo_original>
